<compile_context>
chip_gen: v5e
topology: v5e:2x2
jax: 0.10.0
libtpu: 0.0.40
codegen_flags: <defaults>
</compile_context>

<pallas_src>
import functools

import jax
import jax.numpy as jnp
from jax.experimental import pallas as pl
from jax.experimental.pallas import tpu as pltpu


# ---------------------------------------------------------------------------
# Chip-aware budgets and VMEM accounting helpers.
# ---------------------------------------------------------------------------

def _round_up(n, m):
    return -(-n // m) * m


def _sublane(itemsize):
    # Sublane tile height per dtype width: f32 -> 8, bf16 -> 16, int8/fp8 -> 32.
    return {4: 8, 2: 16, 1: 32}.get(itemsize, 8)


def _padded_2d_bytes(rows, cols, itemsize):
    """VMEM footprint of a 2-D tile after (sublane, lane) padding."""
    return _round_up(max(rows, 1), _sublane(itemsize)) * _round_up(max(cols, 1), 128) * itemsize


def _chip_budgets():
    """(block_budget, vmem_limit_cap, min_grid_steps) for the current chip."""
    kind = ""
    try:  # capability probe only; never gates correctness
        kind = jax.devices()[0].device_kind.lower()
    except Exception:
        pass
    is_v7 = ("v7" in kind) or ("7x" in kind)
    vmem_cap = 64 * 1024 * 1024 if is_v7 else 128 * 1024 * 1024
    try:  # capability probe only
        cap = getattr(pltpu.get_tpu_info(), "vmem_capacity_bytes", None)
        if cap:
            vmem_cap = int(cap)
    except Exception:
        pass
    if is_v7 or vmem_cap <= 64 * 1024 * 1024:
        # v7x-class: 64 MiB physical VMEM per TensorCore -> stay conservative.
        block_budget, vmem_limit_cap = 18 << 20, 40 << 20
    else:
        # v5e / v6e: 128 MiB physical VMEM -> exploit it.
        block_budget, vmem_limit_cap = 56 << 20, 96 << 20
    min_steps = 4 if is_v7 else 3   # >=2 pipelined steps per TC on megacore chips
    return block_budget, vmem_limit_cap, min_steps


def _choose_batch_tile(B, per_batch_bytes, budget_bytes, min_steps):
    """Largest divisor of B whose double-buffered in+out blocks fit the budget,
    shrunk (down to a ~1 MiB block floor) so the grid has >= min_steps steps."""
    max_bt = max(1, budget_bytes // (4 * per_batch_bytes))   # x + out, 2 buffers each
    bt = max(1, min(B, max_bt))
    floor_bt = max(1, -(-(1 << 20) // per_batch_bytes))      # keep blocks >= ~1 MiB
    bt = min(bt, max(floor_bt, B // min_steps, 1))           # prefer >= min_steps steps
    while B % bt != 0:                                       # avoid partial batch blocks
        bt -= 1
    return bt


# ---------------------------------------------------------------------------
# Kernels.
# ---------------------------------------------------------------------------

def _se_fused_kernel(x_ref, w1t_ref, b1_ref, w2t_ref, b2_ref, o_ref, *, inv_hw):
    # x_ref/o_ref: (bt, C, HW)   w1t: (C, Cr)  b1: (1, Cr)  w2t: (Cr, C)  b2: (1, C)
    x = x_ref[...]                                                 # input dtype, no f32 slab
    pooled = jnp.sum(x, axis=-1, dtype=jnp.float32) * inv_hw       # squeeze: (bt, C) f32
    h = jnp.dot(pooled, w1t_ref[...],
                preferred_element_type=jnp.float32) + b1_ref[...]  # FC1: (bt, Cr)
    h = jnp.maximum(h, 0.0)                                        # ReLU
    s = jnp.dot(h, w2t_ref[...],
                preferred_element_type=jnp.float32) + b2_ref[...]  # FC2: (bt, C)
    s = jnp.clip(s + 3.0, 0.0, 6.0) * (1.0 / 6.0)                  # hard_sigmoid = relu6(x+3)/6
    # Dominant elementwise op stays in the input dtype.
    o_ref[...] = (x * s.astype(x.dtype)[:, :, None]).astype(o_ref.dtype)


def _pool_kernel(x_ref, sum_ref, *, hw_total, hw_chunk, has_tail):
    # x_ref: (1, C, hw_chunk)   sum_ref: (1, C, 1) f32 accumulator.
    hi = pl.program_id(1)

    @pl.when(hi == 0)
    def _():
        sum_ref[...] = jnp.zeros_like(sum_ref)

    x = x_ref[...]
    if has_tail:
        lane = jax.lax.broadcasted_iota(jnp.int32, x.shape, 2) + hi * hw_chunk
        x = jnp.where(lane < hw_total, x, jnp.zeros_like(x))       # mask padded tail reads
    sum_ref[...] += jnp.sum(x, axis=-1, dtype=jnp.float32, keepdims=True)


def _scale_kernel(x_ref, s_ref, o_ref):
    # x_ref/o_ref: (1, C, hw_chunk)   s_ref: (1, C, 1) f32
    x = x_ref[...]
    o_ref[...] = (x * s_ref[...].astype(x.dtype)).astype(o_ref.dtype)


# ---------------------------------------------------------------------------
# Wrappers.
# ---------------------------------------------------------------------------

def _se_fused(x3, w1t, b1r, w2t, b2r, HW, per_batch, param_bytes,
              block_budget, vmem_cap, min_steps, donate_x):
    B, C, _ = x3.shape
    Cr = w1t.shape[1]
    itemsize = x3.dtype.itemsize

    bt = _choose_batch_tile(B, per_batch, max(block_budget - param_bytes, 4 * per_batch),
                            min_steps)
    grid = (B // bt,)

    vmem_need = 4 * bt * per_batch + param_bytes
    vmem_limit = int(min(max(vmem_need * 3 // 2 + (2 << 20), 16 << 20), vmem_cap))

    cost = pl.CostEstimate(
        flops=4 * B * C * Cr + 2 * B * C * HW,
        transcendentals=0,
        bytes_accessed=2 * B * C * HW * itemsize
        + int((w1t.size + w2t.size + b1r.size + b2r.size) * w1t.dtype.itemsize),
    )

    kernel = functools.partial(_se_fused_kernel, inv_hw=1.0 / HW)
    alias = {0: 0} if donate_x else {}

    return pl.pallas_call(
        kernel,
        out_shape=jax.ShapeDtypeStruct((B, C, HW), x3.dtype),
        grid_spec=pltpu.PrefetchScalarGridSpec(
            num_scalar_prefetch=0,
            grid=grid,
            in_specs=[
                pl.BlockSpec((bt, C, HW), lambda b: (b, 0, 0)),   # x slab (lane axis = HW)
                pl.BlockSpec((C, Cr), lambda b: (0, 0)),          # W1^T (constant block idx)
                pl.BlockSpec((1, Cr), lambda b: (0, 0)),          # b1
                pl.BlockSpec((Cr, C), lambda b: (0, 0)),          # W2^T
                pl.BlockSpec((1, C), lambda b: (0, 0)),           # b2
            ],
            out_specs=pl.BlockSpec((bt, C, HW), lambda b: (b, 0, 0)),
        ),
        compiler_params=pltpu.CompilerParams(
            dimension_semantics=("parallel",),
            vmem_limit_bytes=vmem_limit,
        ),
        cost_estimate=cost,
        input_output_aliases=alias,
    )(x3, w1t, b1r, w2t, b2r)


def _se_split(x3, w1t, b1r, w2t, b2r, HW, itemsize,
              block_budget, vmem_cap, donate_x, hw_chunk_override):
    B, C, _ = x3.shape

    # ~2 MiB x blocks, lane-aligned to 128 unless a chunk covers all of HW.
    c_pad = _round_up(C, _sublane(itemsize))
    if hw_chunk_override is not None:
        hw_chunk = max(128, (int(hw_chunk_override) // 128) * 128)
    else:
        hw_chunk = max(128, ((2 << 20) // (c_pad * itemsize)) // 128 * 128)
    if hw_chunk >= HW:
        hw_chunk = HW
    n_hw = pl.cdiv(HW, hw_chunk)
    has_tail = (HW % hw_chunk) != 0

    block_bytes = c_pad * _round_up(hw_chunk, 128) * itemsize
    scale_bytes = c_pad * 128 * 4
    vmem_limit = int(min(max(4 * block_bytes + 4 * scale_bytes + (4 << 20), 16 << 20),
                         vmem_cap))

    # Pass 1: tiled global-average-pool (sums); reduction axis (HW chunks) last.
    # TODO(synk): also block the C axis so B=1 inference can use both v7x TensorCores here.
    pool_kernel = functools.partial(_pool_kernel, hw_total=HW, hw_chunk=hw_chunk,
                                    has_tail=has_tail)
    pooled_sum = pl.pallas_call(
        pool_kernel,
        out_shape=jax.ShapeDtypeStruct((B, C, 1), jnp.float32),
        grid_spec=pltpu.PrefetchScalarGridSpec(
            num_scalar_prefetch=0,
            grid=(B, n_hw),
            in_specs=[pl.BlockSpec((1, C, hw_chunk), lambda b, h: (b, 0, h))],
            out_specs=pl.BlockSpec((1, C, 1), lambda b, h: (b, 0, 0)),
        ),
        compiler_params=pltpu.CompilerParams(
            dimension_semantics=("parallel", "arbitrary"),
            vmem_limit_bytes=vmem_limit,
        ),
    )(x3)

    # Excite MLP: tiny (B, C)-sized work -> plain XLA is fine (not a bottleneck).
    pooled = pooled_sum[:, :, 0] * (1.0 / HW)
    h = jnp.maximum(jnp.dot(pooled, w1t, preferred_element_type=jnp.float32) + b1r, 0.0)
    s = jnp.dot(h, w2t, preferred_element_type=jnp.float32) + b2r
    s = jnp.clip(s + 3.0, 0.0, 6.0) * (1.0 / 6.0)
    s3 = s.astype(jnp.float32)[:, :, None]                        # (B, C, 1)

    # Pass 2: tiled channelwise rescale.
    alias = {0: 0} if donate_x else {}
    return pl.pallas_call(
        _scale_kernel,
        out_shape=jax.ShapeDtypeStruct((B, C, HW), x3.dtype),
        grid_spec=pltpu.PrefetchScalarGridSpec(
            num_scalar_prefetch=0,
            grid=(B, n_hw),
            in_specs=[
                pl.BlockSpec((1, C, hw_chunk), lambda b, h: (b, 0, h)),
                pl.BlockSpec((1, C, 1), lambda b, h: (b, 0, 0)),
            ],
            out_specs=pl.BlockSpec((1, C, hw_chunk), lambda b, h: (b, 0, h)),
        ),
        compiler_params=pltpu.CompilerParams(
            dimension_semantics=("parallel", "parallel"),
            vmem_limit_bytes=vmem_limit,
        ),
        input_output_aliases=alias,
    )(x3, s3)


def se_module(x_nchw, w1, b1, w2, b2, *, donate_x=False,
              force_split=False, hw_chunk_override=None):
    """SE forward.  x_nchw: (B, C, H, W); w1: (C//4, C); b1: (C//4,);
    w2: (C, C//4); b2: (C,).  Matches PyTorch SE_module.forward."""
    B, C, H, W = x_nchw.shape
    Cr = w1.shape[0]
    HW = H * W
    itemsize = x_nchw.dtype.itemsize

    x3 = x_nchw.reshape(B, C, HW)          # free reshape; no lane-padding HBM round trip
    w1t = jnp.transpose(w1)                # (C, Cr)
    w2t = jnp.transpose(w2)                # (Cr, C)
    b1r = b1.reshape(1, Cr)
    b2r = b2.reshape(1, C)

    block_budget, vmem_cap, min_steps = _chip_budgets()

    # VMEM footprint of one batch element's (C, HW) slab after (sublane, lane) tiling.
    per_batch = _padded_2d_bytes(C, HW, itemsize)
    # Params get two live buffers each in the pipeline (constant block index
    # => no re-DMA, but double-buffered storage); account for that.
    param_bytes = 2 * (_padded_2d_bytes(C, Cr, w1t.dtype.itemsize)
                       + _padded_2d_bytes(Cr, C, w2t.dtype.itemsize)
                       + _padded_2d_bytes(1, Cr, b1r.dtype.itemsize)
                       + _padded_2d_bytes(1, C, b2r.dtype.itemsize))

    fused_fits = (4 * per_batch + param_bytes) <= block_budget
    if force_split or not fused_fits:
        out3 = _se_split(x3, w1t, b1r, w2t, b2r, HW, itemsize,
                         block_budget, vmem_cap, donate_x, hw_chunk_override)
    else:
        out3 = _se_fused(x3, w1t, b1r, w2t, b2r, HW, per_batch, param_bytes,
                         block_budget, vmem_cap, min_steps, donate_x)
    return out3.reshape(B, C, H, W)


def se_reference(x, w1, b1, w2, b2):
    pooled = jnp.mean(x, axis=(2, 3))                              # (B, C)
    h = jnp.maximum(pooled @ w1.T + b1, 0.0)
    s = jnp.clip((h @ w2.T + b2) + 3.0, 0.0, 6.0) / 6.0
    return x * s[:, :, None, None]


if __name__ == "__main__":
    key = jax.random.PRNGKey(0)
    kx, k1, k2, k3, k4, kx2, k5, k6, k7, k8 = jax.random.split(key, 10)

    # --- Test 1: fused path (default) --------------------------------------
    B, C, H, W = 2, 8, 16, 16
    Cr = C // 4
    x = jax.random.normal(kx, (B, C, H, W), dtype=jnp.float32)
    w1 = jax.random.normal(k1, (Cr, C), dtype=jnp.float32) * 0.3
    b1 = jax.random.normal(k2, (Cr,), dtype=jnp.float32) * 0.1
    w2 = jax.random.normal(k3, (C, Cr), dtype=jnp.float32) * 0.3
    b2 = jax.random.normal(k4, (C,), dtype=jnp.float32) * 0.1

    out = jax.block_until_ready(se_module(x, w1, b1, w2, b2))
    ref = se_reference(x, w1, b1, w2, b2)
    assert out.shape == (B, C, H, W)
    assert jnp.allclose(out, ref, atol=1e-5, rtol=1e-5), "fused path mismatch"

    # --- Test 2: split (pool + excite + rescale) path, forced, with a
    #     partial HW-chunk tail (HW = 400, chunk = 128) ----------------------
    B2, C2, H2, W2 = 2, 16, 20, 20
    Cr2 = C2 // 4
    x2 = jax.random.normal(kx2, (B2, C2, H2, W2), dtype=jnp.float32)
    w1b = jax.random.normal(k5, (Cr2, C2), dtype=jnp.float32) * 0.3
    b1b = jax.random.normal(k6, (Cr2,), dtype=jnp.float32) * 0.1
    w2b = jax.random.normal(k7, (C2, Cr2), dtype=jnp.float32) * 0.3
    b2b = jax.random.normal(k8, (C2,), dtype=jnp.float32) * 0.1

    out2 = jax.block_until_ready(
        se_module(x2, w1b, b1b, w2b, b2b, force_split=True, hw_chunk_override=128))
    ref2 = se_reference(x2, w1b, b1b, w2b, b2b)
    assert out2.shape == (B2, C2, H2, W2)
    assert jnp.allclose(out2, ref2, atol=1e-5, rtol=1e-5), "split path mismatch"

    print("KERNEL_OK")
</pallas_src>

<mosaic_0001>
module attributes {stable_mosaic.version = 11 : i64} {
  func.func @_se_fused_kernel(%arg0: i32, %arg1: memref<2x8x256xf32, #tpu.memory_space<vmem>>, %arg2: memref<8x2xf32, #tpu.memory_space<vmem>>, %arg3: memref<1x2xf32, #tpu.memory_space<vmem>>, %arg4: memref<2x8xf32, #tpu.memory_space<vmem>>, %arg5: memref<1x8xf32, #tpu.memory_space<vmem>>, %arg6: memref<2x8x256xf32, #tpu.memory_space<vmem>>) attributes {dimension_semantics = [#tpu.dimension_semantics<parallel>], iteration_bounds = array<i64: 1>, scalar_prefetch = 0 : i64, scratch_operands = 0 : i64, tpu.core_type = #tpu.core_type<tc>, window_params = [{transform_indices = @transform_0, window_bounds = array<i64: 2, 8, 256>}, {pipeline_mode = #tpu.pipeline_mode<synchronous>, transform_indices = @transform_1, window_bounds = array<i64: 8, 2>}, {pipeline_mode = #tpu.pipeline_mode<synchronous>, transform_indices = @transform_2, window_bounds = array<i64: 1, 2>}, {pipeline_mode = #tpu.pipeline_mode<synchronous>, transform_indices = @transform_3, window_bounds = array<i64: 2, 8>}, {pipeline_mode = #tpu.pipeline_mode<synchronous>, transform_indices = @transform_4, window_bounds = array<i64: 1, 8>}, {transform_indices = @transform_5, window_bounds = array<i64: 2, 8, 256>}]} {
    %c0 = arith.constant 0 : index
    %c0_0 = arith.constant 0 : index
    %c0_1 = arith.constant 0 : index
    %0 = vector.load %arg1[%c0, %c0_0, %c0_1] : memref<2x8x256xf32, #tpu.memory_space<vmem>>, vector<2x8x256xf32>
    %cst = arith.constant dense<0.000000e+00> : vector<2x8xf32>
    %1 = vector.multi_reduction <add>, %0, %cst [2] : vector<2x8x256xf32> to vector<2x8xf32>
    %cst_2 = arith.constant 3.906250e-03 : f32
    %2 = vector.broadcast %cst_2 : f32 to vector<2x8xf32>
    %3 = arith.mulf %1, %2 : vector<2x8xf32>
    %c0_3 = arith.constant 0 : index
    %c0_4 = arith.constant 0 : index
    %4 = vector.load %arg2[%c0_3, %c0_4] : memref<8x2xf32, #tpu.memory_space<vmem>>, vector<8x2xf32>
    %cst_5 = arith.constant dense<0.000000e+00> : vector<2x2xf32>
    %5 = tpu.matmul %3, %4, %cst_5 {dimension_numbers = #tpu.dot_dimension_numbers<[1], [0], [0], [1], [0, 0, 1, 1], [], []>} : vector<2x8xf32>, vector<8x2xf32>, vector<2x2xf32> -> vector<2x2xf32>
    %c0_6 = arith.constant 0 : index
    %c0_7 = arith.constant 0 : index
    %6 = vector.load %arg3[%c0_6, %c0_7] : memref<1x2xf32, #tpu.memory_space<vmem>>, vector<1x2xf32>
    %7 = vector.broadcast %6 : vector<1x2xf32> to vector<2x2xf32>
    %8 = arith.addf %5, %7 : vector<2x2xf32>
    %cst_8 = arith.constant 0.000000e+00 : f32
    %9 = vector.broadcast %cst_8 : f32 to vector<2x2xf32>
    %10 = arith.maximumf %8, %9 : vector<2x2xf32>
    %c0_9 = arith.constant 0 : index
    %c0_10 = arith.constant 0 : index
    %11 = vector.load %arg4[%c0_9, %c0_10] : memref<2x8xf32, #tpu.memory_space<vmem>>, vector<2x8xf32>
    %cst_11 = arith.constant dense<0.000000e+00> : vector<2x8xf32>
    %12 = tpu.matmul %10, %11, %cst_11 {dimension_numbers = #tpu.dot_dimension_numbers<[1], [0], [0], [1], [0, 0, 1, 1], [], []>} : vector<2x2xf32>, vector<2x8xf32>, vector<2x8xf32> -> vector<2x8xf32>
    %c0_12 = arith.constant 0 : index
    %c0_13 = arith.constant 0 : index
    %13 = vector.load %arg5[%c0_12, %c0_13] : memref<1x8xf32, #tpu.memory_space<vmem>>, vector<1x8xf32>
    %14 = vector.broadcast %13 : vector<1x8xf32> to vector<2x8xf32>
    %15 = arith.addf %12, %14 : vector<2x8xf32>
    %cst_14 = arith.constant 3.000000e+00 : f32
    %16 = vector.broadcast %cst_14 : f32 to vector<2x8xf32>
    %17 = arith.addf %15, %16 : vector<2x8xf32>
    %cst_15 = arith.constant 0.000000e+00 : f32
    %cst_16 = arith.constant 6.000000e+00 : f32
    %18 = vector.broadcast %cst_15 : f32 to vector<2x8xf32>
    %19 = arith.maximumf %18, %17 : vector<2x8xf32>
    %20 = vector.broadcast %cst_16 : f32 to vector<2x8xf32>
    %21 = arith.minimumf %20, %19 : vector<2x8xf32>
    %cst_17 = arith.constant 0.166666672 : f32
    %22 = vector.broadcast %cst_17 : f32 to vector<2x8xf32>
    %23 = arith.mulf %21, %22 : vector<2x8xf32>
    %24 = vector.shape_cast %23 : vector<2x8xf32> to vector<2x8x1xf32>
    %25 = vector.broadcast %24 : vector<2x8x1xf32> to vector<2x8x256xf32>
    %26 = arith.mulf %0, %25 : vector<2x8x256xf32>
    %c0_18 = arith.constant 0 : index
    %c0_19 = arith.constant 0 : index
    %c0_20 = arith.constant 0 : index
    %27 = vector.load %arg6[%c0_18, %c0_19, %c0_20] : memref<2x8x256xf32, #tpu.memory_space<vmem>>, vector<2x8x256xf32>
    tpu.vector_store %arg6[%c0_18, %c0_19, %c0_20], %26 {strides = array<i32>} : memref<2x8x256xf32, #tpu.memory_space<vmem>>, vector<2x8x256xf32>,
    return
  }
  func.func @transform_0(%arg0: i32) -> (i32, i32, i32) {
    %c0_i32 = arith.constant 0 : i32
    %c0_i32_0 = arith.constant 0 : i32
    %c0_i32_1 = arith.constant 0 : i32
    return %arg0, %c0_i32, %c0_i32_0 : i32, i32, i32
  }
  func.func @transform_1(%arg0: i32) -> (i32, i32) {
    %c0_i32 = arith.constant 0 : i32
    %c0_i32_0 = arith.constant 0 : i32
    %c0_i32_1 = arith.constant 0 : i32
    return %c0_i32, %c0_i32_0 : i32, i32
  }
  func.func @transform_2(%arg0: i32) -> (i32, i32) {
    %c0_i32 = arith.constant 0 : i32
    %c0_i32_0 = arith.constant 0 : i32
    %c0_i32_1 = arith.constant 0 : i32
    return %c0_i32, %c0_i32_0 : i32, i32
  }
  func.func @transform_3(%arg0: i32) -> (i32, i32) {
    %c0_i32 = arith.constant 0 : i32
    %c0_i32_0 = arith.constant 0 : i32
    %c0_i32_1 = arith.constant 0 : i32
    return %c0_i32, %c0_i32_0 : i32, i32
  }
  func.func @transform_4(%arg0: i32) -> (i32, i32) {
    %c0_i32 = arith.constant 0 : i32
    %c0_i32_0 = arith.constant 0 : i32
    %c0_i32_1 = arith.constant 0 : i32
    return %c0_i32, %c0_i32_0 : i32, i32
  }
  func.func @transform_5(%arg0: i32) -> (i32, i32, i32) {
    %c0_i32 = arith.constant 0 : i32
    %c0_i32_0 = arith.constant 0 : i32
    %c0_i32_1 = arith.constant 0 : i32
    return %arg0, %c0_i32, %c0_i32_0 : i32, i32, i32
  }
}

</mosaic_0001>

<llo_original>
// kernel: tpu_custom_call.1
$region0: #{tpu_custom_call.1}
  #allocation0 [shape = 'u32[]', space=smem, size = 0x4, offset = 0x4, fixed_abs, tag = 'smem constant byte address 0x4 - core index']
  #allocation1 [shape = 'u32[72,128]{1,0:T(1,128)}', space=vmem, size = 0x9000, scoped, tag = 'internal scratch']
  %s0 = inlined_call_operand.hbm [shape: f32[2,8,256], index: 0, kind: input, shape index: {}]
  %s1 = inlined_call_operand.vmem [shape: f32[8,2], index: 1, kind: input, shape index: {}]
  %s2 = inlined_call_operand.vmem [shape: f32[1,2], index: 2, kind: input, shape index: {}]
  %s3 = inlined_call_operand.vmem [shape: f32[2,8], index: 3, kind: input, shape index: {}]
  %s4 = inlined_call_operand.vmem [shape: f32[1,8], index: 4, kind: input, shape index: {}]
  %s5 = inlined_call_operand.hbm [shape: f32[2,8,256], index: 5, kind: output, shape index: {}]
  %s6 = sld [smem:[#allocation0]]
  $region34: #{tpu_custom_call.1} parent=0
    _
  %s8 = ssub.s32 1, %s6
  %s9 = scalar_select 0, %s8, %s6
  $region1: #{tpu_custom_call.1} parent=0
    #allocation2 [shape = 'u8[16384]{0}', space=vmem, size = 0x4000, scoped, tag = 'input window, operand 0, single buffered']
    #allocation3 [shape = 's32[1]{0}', space=sflag, size = 0x4, scoped, tag = 'scoped memory for tpu_custom_call.1']
    #allocation4 [shape = 's32[1]{0}', space=sflag, size = 0x4, scoped, tag = 'scoped memory for tpu_custom_call.1']
    #allocation5 [shape = 'u8[16384]{0}', space=vmem, size = 0x4000, scoped, tag = 'output window, operand 0, single buffered']
    %10 = vsyncpa [#allocation3], 0
    %11 = vsyncpa [#allocation4], 0
    // Predicated region
    $region2: #{tpu_custom_call.1} parent=1 // pred_check
      _
    $region3: #{tpu_custom_call.1} parent=1 // pred_check_branch
      %13 = sbr.rel (0) target = $region5
    $region4: #{tpu_custom_call.1} parent=1 // pred_region
      %15 = vsyncadd [#allocation3], 0
      %s16 = sshll.u32 %s0, 4
      %s17 = int_to_ptr.hbm [resolvable:$true] %s16
      %s18 = sshll.u32 [#allocation2], 4
      %s19 = int_to_ptr.vmem [resolvable:$true] %s18
      %24 = dma.hbm_to_vmem [thread:$0]  %s17, 512, %s19, [#allocation3], 256, 256, 16
    $region5: #{tpu_custom_call.1} parent=1 // pred_fallthru
      _
    // Predicated region
    $region6: #{tpu_custom_call.1} parent=1 // pred_check
      _
    $region7: #{tpu_custom_call.1} parent=1 // pred_check_branch
      %26 = sbr.rel (0) target = $region9
    $region8: #{tpu_custom_call.1} parent=1 // pred_region
      _
    $region9: #{tpu_custom_call.1} parent=1 // pred_fallthru
      _
    // Predicated region
    $region10: #{tpu_custom_call.1} parent=1 // pred_check
      _
    $region11: #{tpu_custom_call.1} parent=1 // pred_check_branch
      %28 = sbr.rel (0) target = $region13
    $region12: #{tpu_custom_call.1} parent=1 // pred_region
      _
    $region13: #{tpu_custom_call.1} parent=1 // pred_fallthru
      _
    // Predicated region
    $region14: #{tpu_custom_call.1} parent=1 // pred_check
      _
    $region15: #{tpu_custom_call.1} parent=1 // pred_check_branch
      %30 = sbr.rel (0) target = $region17
    $region16: #{tpu_custom_call.1} parent=1 // pred_region
      _
    $region17: #{tpu_custom_call.1} parent=1 // pred_fallthru
      _
    // Predicated region
    $region18: #{tpu_custom_call.1} parent=1 // pred_check
      _
    $region19: #{tpu_custom_call.1} parent=1 // pred_check_branch
      %32 = sbr.rel (0) target = $region21
    $region20: #{tpu_custom_call.1} parent=1 // pred_region
      _
    $region21: #{tpu_custom_call.1} parent=1 // pred_fallthru
      _
    // Predicated region
    $region22: #{tpu_custom_call.1} parent=1 // pred_check
      _
    $region23: #{tpu_custom_call.1} parent=1 // pred_check_branch
      %34 = sbr.rel (0) target = $region25
    $region24: #{tpu_custom_call.1} parent=1 // pred_region
      %36 = dma.done [#allocation3], 512
    $region25: #{tpu_custom_call.1} parent=1 // pred_fallthru
      _
    %v37 = vld [vmem:[#allocation2] sm:$0xff]
    %v38 = vld [vmem:[#allocation2 + $0x8] sm:$0xff]
    %v39 = vld [vmem:[#allocation2 + $0x10] sm:$0xff]
    %v40 = vld [vmem:[#allocation2 + $0x18] sm:$0xff]
    %v41 = vadd.f32 %v37, %v38
    %42 = vadd.xlane.f32.xlu0 %v41
    %v43 = vpop.xlane.xlu0 %42
    %v44 = vadd.f32 %v39, %v40
    %45 = vadd.xlane.f32.xlu0 %v44
    %v46 = vpop.xlane.xlu0 %45
    %v47 = vmul.f32 %v43, 0.00390625
    %v48 = vmul.f32 %v46, 0.00390625
    %v49 = vld [vmem:[%s1] sm:$0xff]
    %v50 = vld [vmem:[%s2] sm:$0x1]
    %v52 = vperm.slane %v50, 0
    %v56 = vlaneseq
    %v57 = vand.u32 %v56, 127
    %v58 = vperm.slane %v47, %v57
    %v59 = vperm.slane %v48, %v57
    %vm60 = vcmask 1041409
    %v61 = vsel %vm60, %v59, %v58
    %vm62 = vcmask 64512
    %v63 = vsel %vm62, %v61, 0
    %65 = vmatpush.msra.mxu0 0.0
    %66 = vmatpush.msra.mxu0 0.0
    %67 = vmatpush.msra.mxu0 0.0
    %68 = vmatpush.msra.mxu0 0.0
    %69 = vmatpush.msra.mxu0 0.0
    %70 = vmatpush.msra.mxu0 0.0
    %71 = vmatpush.msra.mxu0 0.0
    %72 = vmatpush.msra.mxu0 0.0
    %73 = vmatpush.msra.mxu0 0.0
    %74 = vmatpush.msra.mxu0 0.0
    %75 = vmatpush.msra.mxu0 0.0
    %76 = vmatpush.msra.mxu0 0.0
    %77 = vmatpush.msra.mxu0 0.0
    %78 = vmatpush.msra.mxu0 0.0
    %79 = vmatpush.msra.mxu0 0.0
    %80 = vmatpush.msra.mxu0 %v49
    %81 = vmatmul.f32.gmra.mxu0 %v63
    %v82 = vpop.f32.mrf.mxu0
    %v83 = vadd.f32 %v52, %v82
    %84 = vdwg.mxu0
    %v85 = vmax.f32 %v83, 0.0
    %v86 = vld [vmem:[%s3] sm:$0x3]
    %v87 = vld [vmem:[%s4] sm:$0x1]
    %v89 = vperm.slane %v87, 0
    %vm91 = vcmask 15360
    %v93 = vsel %vm91, %v85, 0
    %vm95 = vcmask 1041408
    %v97 = vsel %vm95, %v86, 0
    %99 = vmatpush.msra.mxu0 0.0
    %100 = vmatpush.msra.mxu0 0.0
    %101 = vmatpush.msra.mxu0 0.0
    %102 = vmatpush.msra.mxu0 0.0
    %103 = vmatpush.msra.mxu0 0.0
    %104 = vmatpush.msra.mxu0 0.0
    %105 = vmatpush.msra.mxu0 0.0
    %106 = vmatpush.msra.mxu0 0.0
    %107 = vmatpush.msra.mxu0 0.0
    %108 = vmatpush.msra.mxu0 0.0
    %109 = vmatpush.msra.mxu0 0.0
    %110 = vmatpush.msra.mxu0 0.0
    %111 = vmatpush.msra.mxu0 0.0
    %112 = vmatpush.msra.mxu0 0.0
    %113 = vmatpush.msra.mxu0 0.0
    %114 = vmatpush.msra.mxu0 %v97
    %115 = vmatmul.f32.gmra.mxu0 %v93
    %v116 = vpop.f32.mrf.mxu0
    %v117 = vadd.f32 %v89, %v116
    %118 = vdwg.mxu0
    %v119 = vadd.f32 %v117, 3.0
    %v120 = vmax.f32 %v119, 0.0
    %v121 = vmin.f32 %v120, 6.0
    %v122 = vmul.f32 %v121, 0.16666667
    %v123 = vperm.slane %v122, 0
    %v124 = vlaneseq
    %v125 = vshrl.u32 %v124, 7
    %127 = vset.pattern.permute.xlu0 %v125
    %128 = vperm.xlu0 %127, %v123
    %v129 = vpop.permute.xlu0 %128
    %v130 = vperm.slane %v122, 1
    %v131 = vlaneseq
    %v132 = vshrl.u32 %v131, 7
    %134 = vset.pattern.permute.xlu0 %v132
    %135 = vperm.xlu0 %134, %v130
    %v136 = vpop.permute.xlu0 %135
    %v137 = vmul.f32 %v37, %v129
    %v138 = vmul.f32 %v38, %v129
    %v139 = vmul.f32 %v39, %v136
    %v140 = vmul.f32 %v40, %v136
    %141 = vst [vmem:[#allocation5] sm:$0xff] %v137
    %142 = vst [vmem:[#allocation5 + $0x8] sm:$0xff] %v138
    %143 = vst [vmem:[#allocation5 + $0x10] sm:$0xff] %v139
    %144 = vst [vmem:[#allocation5 + $0x18] sm:$0xff] %v140
    // Predicated region
    $region26: #{tpu_custom_call.1} parent=1 // pred_check
      _
    $region27: #{tpu_custom_call.1} parent=1 // pred_check_branch
      %146 = sbr.rel (0) target = $region29
    $region28: #{tpu_custom_call.1} parent=1 // pred_region
      %148 = vsyncadd [#allocation4], 0
      %s149 = sshll.u32 [#allocation5], 4
      %s150 = int_to_ptr.vmem [resolvable:$true] %s149
      %s151 = sshll.u32 %s5, 4
      %s152 = int_to_ptr.hbm [resolvable:$true] %s151
      %157 = dma.vmem_to_hbm [thread:$0]  %s150, 512, %s152, [#allocation4], 256, 256, 16
    $region29: #{tpu_custom_call.1} parent=1 // pred_fallthru
      _
    // Predicated region
    $region30: #{tpu_custom_call.1} parent=1 // pred_check
      _
    $region31: #{tpu_custom_call.1} parent=1 // pred_check_branch
      %159 = sbr.rel (0) target = $region33
    $region32: #{tpu_custom_call.1} parent=1 // pred_region
      %161 = dma.done [#allocation4], 512
    $region33: #{tpu_custom_call.1} parent=1 // pred_fallthru
      _
    %162 = vsyncpa [#allocation3], 1
    %163 = vsyncpa [#allocation4], 1

</llo_original>
